<compile_context>
chip_gen: v7x
topology: tpu7x:2x2x1
jax: 0.10.0
libtpu: 0.0.40
codegen_flags: <defaults>
</compile_context>

<pallas_src>
import jax
import jax.numpy as jnp
import numpy as np
from jax.experimental import pallas as pl
from jax.experimental.pallas import tpu as pltpu

EPS = 1e-5  # InstanceNorm1d default eps

# vslab row indices (each row is one padded row-vector).
_V_WEMB, _V_BEMB, _V_BATTN, _V_BCMB, _V_BI, _V_BHN, _V_WOUT, _V_BOUT = range(8)
# wslab plane indices (each plane is one (H, 128)-padded matmul weight).
_W_ATTN_E, _W_ATTN_H, _W_CMB_E, _W_CMB_A, _W_GRU_I, _W_GRU_H = range(6)


def _round_up(x, m):
    return (x + m - 1) // m * m


def _attn_decoder_kernel(x_ref, h0_ref, enc_ref, w_ref, v_ref, out_ref):
    f32 = jnp.float32
    B = out_ref.shape[0]
    H = w_ref.shape[1]          # hidden size
    L = enc_ref.shape[1]        # input_len (attention span)
    H2, H3 = 2 * H, 3 * H

    x = x_ref[...].astype(f32)       # (B, 1)   decoder input (time dim squeezed)
    h0 = h0_ref[...].astype(f32)     # (B, H)   hidden state
    vec = v_ref[...].astype(f32)     # (8, W)   packed row-vectors

    # embedding = Linear(1 -> H): K=1 so pure VPU broadcast multiply (no MXU).
    emb = x * vec[_V_WEMB:_V_WEMB + 1, :H] + vec[_V_BEMB:_V_BEMB + 1, :H]

    # InstanceNorm1d (affine=False, biased variance, eps=1e-5), single-pass stats.
    mean = jnp.mean(emb, axis=-1, keepdims=True)
    var = jnp.mean(emb * emb, axis=-1, keepdims=True) - mean * mean
    emb = (emb - mean) * jax.lax.rsqrt(var + EPS)
    # dropout: identity at inference.

    # attn(cat(embedded, hidden)) without materializing the concat: two dots.
    scores = (jnp.dot(emb, w_ref[_W_ATTN_E][:, :L], preferred_element_type=f32)
              + jnp.dot(h0, w_ref[_W_ATTN_H][:, :L], preferred_element_type=f32)
              + vec[_V_BATTN:_V_BATTN + 1, :L])                     # (B, L)
    scores = scores - jnp.max(scores, axis=-1, keepdims=True)
    e = jnp.exp(scores)
    denom = jnp.sum(e, axis=-1, keepdims=True)
    inv = pl.reciprocal(denom, approx=True)       # EUP seed (free slot) ...
    inv = inv * (2.0 - denom * inv)               # ... + one Newton step -> ~f32 exact
    attn_w = e * inv                              # (B, L)

    # attn_applied = bmm(attn_w, enc): VPU broadcast-multiply + sublane reduce
    # instead of B serialized MXU micro-matmuls.
    attn_applied = jnp.sum(attn_w[:, :, None] * enc_ref[...].astype(f32), axis=1)  # (B, H)

    # relu(attn_combine(cat(embedded, attn_applied))), concat split again.
    comb = (jnp.dot(emb, w_ref[_W_CMB_E][:, :H], preferred_element_type=f32)
            + jnp.dot(attn_applied, w_ref[_W_CMB_A][:, :H], preferred_element_type=f32)
            + vec[_V_BCMB:_V_BCMB + 1, :H])
    g_in = jnp.maximum(comb, 0.0)                 # (B, H)

    # One GRU-cell step (PyTorch semantics), packed gates r|z|n -> 1 dot / operand.
    gi = (jnp.dot(g_in, w_ref[_W_GRU_I][:, :H3], preferred_element_type=f32)
          + vec[_V_BI:_V_BI + 1, :H3])
    gh = jnp.dot(h0, w_ref[_W_GRU_H][:, :H3], preferred_element_type=f32)
    rz = jax.nn.sigmoid(gi[:, :H2] + gh[:, :H2])
    r = rz[:, :H]
    z = rz[:, H:]
    n = jnp.tanh(gi[:, H2:] + r * (gh[:, H2:] + vec[_V_BHN:_V_BHN + 1, :H]))
    h_new = (1.0 - z) * n + z * h0                # (B, H)

    # out = Linear(H -> 1): N=1 so VPU multiply + lane reduce (no MXU).
    y = (jnp.sum(h_new * vec[_V_WOUT:_V_WOUT + 1, :H], axis=-1, keepdims=True)
         + vec[_V_BOUT:_V_BOUT + 1, :1])          # (B, 1)

    # Single lane-dense packed store: [h_new | attn_w | y | zero pad] -> (B, 128).
    pieces = [h_new, attn_w, y]
    pad_w = out_ref.shape[1] - (H + L + 1)
    if pad_w:
        pieces.append(jnp.zeros((B, pad_w), f32))
    out_ref[...] = jnp.concatenate(pieces, axis=1).astype(out_ref.dtype)


@jax.jit
def attn_decoder_forward(x, hidden, encoder_outputs, kp):
    """AttnDecoderRNN.forward(x, hidden, encoder_outputs).

    x               : (B, 1, 1)   (output_size = 1)
    hidden          : (1, B, H)
    encoder_outputs : (B, L, H)
    returns (output (B,1,1), hidden (1,B,H), attn_weights (B,1,L))
    """
    B, T, O = x.shape
    assert T == 1, "AttnDecoderRNN.forward is a single decode step (T must be 1)."
    assert O == 1, "kernel specializes the module default output_size=1."
    _, L, H = encoder_outputs.shape

    x2 = x.reshape(B, O)        # free: drop unit time dim
    h0 = hidden.reshape(B, H)   # free: drop unit layer dim

    w_out_lanes = _round_up(H + L + 1, 128)   # lane-dense packed output width
    vmem = pl.BlockSpec(memory_space=pltpu.MemorySpace.VMEM)

    packed = pl.pallas_call(
        _attn_decoder_kernel,
        out_shape=jax.ShapeDtypeStruct((B, w_out_lanes), jnp.float32),
        in_specs=[vmem] * 5,
        out_specs=vmem,
    )(x2, h0, encoder_outputs, kp['wslab'], kp['vslab'])

    h_new = packed[:, :H]
    attn_w = packed[:, H:H + L]
    y = packed[:, H + L:H + L + 1]
    return (y.reshape(B, 1, O),
            h_new.reshape(1, B, H),
            attn_w.reshape(B, 1, L))


# ----------------------------------------------------------------------------
# Parameters: torch-layout init + one-time repacking into the kernel layout.
# ----------------------------------------------------------------------------
def init_torch_params(key, hidden_size, output_size, input_len):
    """PyTorch-layout parameters (Linear weight: (out, in); GRU: (3H, in))."""
    H, O, L = hidden_size, output_size, input_len
    ks = jax.random.split(key, 12)

    def unif(k, shape, fan_in):
        bound = 1.0 / np.sqrt(fan_in)
        return jax.random.uniform(k, shape, jnp.float32, -bound, bound)

    return dict(
        w_emb=unif(ks[0], (H, O), O),          b_emb=unif(ks[1], (H,), O),
        w_attn=unif(ks[2], (L, 2 * H), 2 * H), b_attn=unif(ks[3], (L,), 2 * H),
        w_comb=unif(ks[4], (H, 2 * H), 2 * H), b_comb=unif(ks[5], (H,), 2 * H),
        w_ih=unif(ks[6], (3 * H, H), H),       b_ih=unif(ks[7], (3 * H,), H),
        w_hh=unif(ks[8], (3 * H, H), H),       b_hh=unif(ks[9], (3 * H,), H),
        w_out=unif(ks[10], (O, H), H),         b_out=unif(ks[11], (O,), H),
    )


def prepare_kernel_params(p):
    """One-time weight plumbing (outside the hot path):
    transpose to matmul layout, split the concatenated Linears, pack GRU gates,
    pre-fold r/z biases, and consolidate everything into TWO padded slabs so
    the kernel needs only two weight DMAs and all in-kernel weight slices start
    at 128-lane tile boundaries."""
    H = p['w_hh'].shape[1]
    L = p['w_attn'].shape[0]
    O = p['w_out'].shape[0]
    assert O == 1
    W = _round_up(max(L, 3 * H), 128)      # lane width of both slabs

    def pad_cols(a):
        return jnp.pad(a, ((0, 0), (0, W - a.shape[1])))

    w_attn_t = p['w_attn'].T               # (2H, L)
    w_comb_t = p['w_comb'].T               # (2H, H)

    wslab = jnp.stack([
        pad_cols(w_attn_t[:H]),            # _W_ATTN_E : rows multiplying `embedded`
        pad_cols(w_attn_t[H:]),            # _W_ATTN_H : rows multiplying `hidden`
        pad_cols(w_comb_t[:H]),            # _W_CMB_E  : rows multiplying `embedded`
        pad_cols(w_comb_t[H:]),            # _W_CMB_A  : rows multiplying `attn_applied`
        pad_cols(p['w_ih'].T),             # _W_GRU_I  : GRU input weights, gates r|z|n
        pad_cols(p['w_hh'].T),             # _W_GRU_H  : GRU hidden weights
    ])                                     # (6, H, W)

    b_i = jnp.concatenate([p['b_ih'][:2 * H] + p['b_hh'][:2 * H],
                           p['b_ih'][2 * H:]])          # [b_ir+b_hr | b_iz+b_hz | b_in]

    def row(v):
        v = jnp.asarray(v, jnp.float32).reshape(1, -1)
        return jnp.pad(v, ((0, 0), (0, W - v.shape[1])))

    vslab = jnp.concatenate([
        row(p['w_emb'][:, 0]),             # _V_WEMB : embedding weight as a row (O=1)
        row(p['b_emb']),                   # _V_BEMB
        row(p['b_attn']),                  # _V_BATTN
        row(p['b_comb']),                  # _V_BCMB
        row(b_i),                          # _V_BI   : pre-folded r/z + n input biases
        row(p['b_hh'][2 * H:]),            # _V_BHN  : stays inside tanh with r gate
        row(p['w_out'][0]),                # _V_WOUT : output weight as a row (O=1)
        row(p['b_out']),                   # _V_BOUT
    ], axis=0)                             # (8, W)

    return dict(wslab=wslab, vslab=vslab)


# ----------------------------------------------------------------------------
# Pure-JAX reference mirroring the PyTorch forward (torch-layout params).
# ----------------------------------------------------------------------------
def _ref_forward(x, hidden, enc, p):
    emb = x @ p['w_emb'].T + p['b_emb']                        # (B,1,H)
    mean = emb.mean(-1, keepdims=True)
    var = ((emb - mean) ** 2).mean(-1, keepdims=True)
    emb = (emb - mean) / jnp.sqrt(var + EPS)                   # InstanceNorm
    hid_b = jnp.transpose(hidden, (1, 0, 2))                   # (B,1,H)
    attn_in = jnp.concatenate([emb, hid_b], axis=2)            # (B,1,2H)
    attn_w = jax.nn.softmax(attn_in @ p['w_attn'].T + p['b_attn'], axis=2)
    attn_applied = jnp.einsum('bil,blh->bih', attn_w, enc)     # (B,1,H)
    comb_in = jnp.concatenate([emb, attn_applied], axis=2)     # (B,1,2H)
    g = jax.nn.relu(comb_in @ p['w_comb'].T + p['b_comb'])     # (B,1,H)

    h0 = hidden[0]
    H = h0.shape[-1]
    xg = g[:, 0, :]
    gi = xg @ p['w_ih'].T + p['b_ih']
    gh = h0 @ p['w_hh'].T + p['b_hh']
    r = jax.nn.sigmoid(gi[:, :H] + gh[:, :H])
    z = jax.nn.sigmoid(gi[:, H:2 * H] + gh[:, H:2 * H])
    n = jnp.tanh(gi[:, 2 * H:] + r * gh[:, 2 * H:])
    h_new = (1.0 - z) * n + z * h0

    y = h_new[:, None, :] @ p['w_out'].T + p['b_out']          # (B,1,O)
    return y, h_new[None], attn_w


if __name__ == "__main__":
    # Small shapes implied by the module: one decode step, output_size=1.
    # batch=8 fills the 8-sublane vreg tile.
    batch, hidden_size, output_size, input_len = 8, 32, 1, 16

    key = jax.random.PRNGKey(0)
    kx, kh, ke, kp_key = jax.random.split(key, 4)
    x = jax.random.normal(kx, (batch, 1, output_size), jnp.float32)
    hidden = jax.random.normal(kh, (1, batch, hidden_size), jnp.float32)
    enc_out = jax.random.normal(ke, (batch, input_len, hidden_size), jnp.float32)

    torch_params = init_torch_params(kp_key, hidden_size, output_size, input_len)
    kernel_params = prepare_kernel_params(torch_params)

    out, h_new, attn_w = attn_decoder_forward(x, hidden, enc_out, kernel_params)
    jax.block_until_ready((out, h_new, attn_w))

    with jax.default_matmul_precision("highest"):
        out_r, h_r, attn_r = _ref_forward(x, hidden, enc_out, torch_params)

    np.testing.assert_allclose(np.asarray(out), np.asarray(out_r), rtol=2e-4, atol=2e-5)
    np.testing.assert_allclose(np.asarray(h_new), np.asarray(h_r), rtol=2e-4, atol=2e-5)
    np.testing.assert_allclose(np.asarray(attn_w), np.asarray(attn_r), rtol=2e-4, atol=2e-5)

    assert out.shape == (batch, 1, output_size)
    assert h_new.shape == (1, batch, hidden_size)
    assert attn_w.shape == (batch, 1, input_len)
    print("KERNEL_OK")
</pallas_src>

<mosaic_0001>
module attributes {stable_mosaic.version = 11 : i64} {
  func.func @_attn_decoder_kernel(%arg0: memref<8x1xf32, #tpu.memory_space<vmem>>, %arg1: memref<8x32xf32, #tpu.memory_space<vmem>>, %arg2: memref<8x16x32xf32, #tpu.memory_space<vmem>>, %arg3: memref<6x32x128xf32, #tpu.memory_space<vmem>>, %arg4: memref<8x128xf32, #tpu.memory_space<vmem>>, %arg5: memref<8x128xf32, #tpu.memory_space<vmem>>) attributes {dimension_semantics = [], scalar_prefetch = 0 : i64, scratch_operands = 0 : i64, tpu.core_type = #tpu.core_type<tc>} {
    %c0 = arith.constant 0 : index
    %c0_0 = arith.constant 0 : index
    %0 = vector.load %arg0[%c0, %c0_0] : memref<8x1xf32, #tpu.memory_space<vmem>>, vector<8x1xf32>
    %c0_1 = arith.constant 0 : index
    %c0_2 = arith.constant 0 : index
    %1 = vector.load %arg1[%c0_1, %c0_2] : memref<8x32xf32, #tpu.memory_space<vmem>>, vector<8x32xf32>
    %c0_3 = arith.constant 0 : index
    %c0_4 = arith.constant 0 : index
    %2 = vector.load %arg4[%c0_3, %c0_4] : memref<8x128xf32, #tpu.memory_space<vmem>>, vector<8x128xf32>
    %3 = vector.extract_strided_slice %2 {offsets = [0, 0], sizes = [1, 32], strides = [1, 1]} : vector<8x128xf32> to vector<1x32xf32>
    %4 = vector.broadcast %0 : vector<8x1xf32> to vector<8x32xf32>
    %5 = vector.broadcast %3 : vector<1x32xf32> to vector<8x32xf32>
    %6 = arith.mulf %4, %5 : vector<8x32xf32>
    %7 = vector.extract_strided_slice %2 {offsets = [1, 0], sizes = [1, 32], strides = [1, 1]} : vector<8x128xf32> to vector<1x32xf32>
    %8 = vector.broadcast %7 : vector<1x32xf32> to vector<8x32xf32>
    %9 = arith.addf %6, %8 : vector<8x32xf32>
    %cst = arith.constant dense<0.000000e+00> : vector<8xf32>
    %10 = vector.multi_reduction <add>, %9, %cst [1] : vector<8x32xf32> to vector<8xf32>
    %11 = vector.shape_cast %10 : vector<8xf32> to vector<8x1xf32>
    %cst_5 = arith.constant 3.200000e+01 : f32
    %12 = vector.broadcast %cst_5 : f32 to vector<8x1xf32>
    %13 = arith.divf %11, %12 : vector<8x1xf32>
    %14 = arith.mulf %9, %9 : vector<8x32xf32>
    %cst_6 = arith.constant dense<0.000000e+00> : vector<8xf32>
    %15 = vector.multi_reduction <add>, %14, %cst_6 [1] : vector<8x32xf32> to vector<8xf32>
    %16 = vector.shape_cast %15 : vector<8xf32> to vector<8x1xf32>
    %cst_7 = arith.constant 3.200000e+01 : f32
    %17 = vector.broadcast %cst_7 : f32 to vector<8x1xf32>
    %18 = arith.divf %16, %17 : vector<8x1xf32>
    %19 = arith.mulf %13, %13 : vector<8x1xf32>
    %20 = arith.subf %18, %19 : vector<8x1xf32>
    %21 = vector.broadcast %13 : vector<8x1xf32> to vector<8x32xf32>
    %22 = arith.subf %9, %21 : vector<8x32xf32>
    %cst_8 = arith.constant 9.99999974E-6 : f32
    %23 = vector.broadcast %cst_8 : f32 to vector<8x1xf32>
    %24 = arith.addf %20, %23 : vector<8x1xf32>
    %25 = math.rsqrt %24 : vector<8x1xf32>
    %26 = vector.broadcast %25 : vector<8x1xf32> to vector<8x32xf32>
    %27 = arith.mulf %22, %26 : vector<8x32xf32>
    %c0_9 = arith.constant 0 : index
    %c0_10 = arith.constant 0 : index
    %c0_11 = arith.constant 0 : index
    %28 = vector.load %arg3[%c0_9, %c0_10, %c0_11] : memref<6x32x128xf32, #tpu.memory_space<vmem>>, vector<1x32x128xf32>
    %29 = vector.shape_cast %28 : vector<1x32x128xf32> to vector<32x128xf32>
    %30 = vector.extract_strided_slice %29 {offsets = [0, 0], sizes = [32, 16], strides = [1, 1]} : vector<32x128xf32> to vector<32x16xf32>
    %cst_12 = arith.constant dense<0.000000e+00> : vector<8x16xf32>
    %31 = tpu.matmul %27, %30, %cst_12 {dimension_numbers = #tpu.dot_dimension_numbers<[1], [0], [0], [1], [0, 0, 1, 1], [], []>} : vector<8x32xf32>, vector<32x16xf32>, vector<8x16xf32> -> vector<8x16xf32>
    %c1 = arith.constant 1 : index
    %c0_13 = arith.constant 0 : index
    %c0_14 = arith.constant 0 : index
    %32 = vector.load %arg3[%c1, %c0_13, %c0_14] : memref<6x32x128xf32, #tpu.memory_space<vmem>>, vector<1x32x128xf32>
    %33 = vector.shape_cast %32 : vector<1x32x128xf32> to vector<32x128xf32>
    %34 = vector.extract_strided_slice %33 {offsets = [0, 0], sizes = [32, 16], strides = [1, 1]} : vector<32x128xf32> to vector<32x16xf32>
    %cst_15 = arith.constant dense<0.000000e+00> : vector<8x16xf32>
    %35 = tpu.matmul %1, %34, %cst_15 {dimension_numbers = #tpu.dot_dimension_numbers<[1], [0], [0], [1], [0, 0, 1, 1], [], []>} : vector<8x32xf32>, vector<32x16xf32>, vector<8x16xf32> -> vector<8x16xf32>
    %36 = arith.addf %31, %35 : vector<8x16xf32>
    %37 = vector.extract_strided_slice %2 {offsets = [2, 0], sizes = [1, 16], strides = [1, 1]} : vector<8x128xf32> to vector<1x16xf32>
    %38 = vector.broadcast %37 : vector<1x16xf32> to vector<8x16xf32>
    %39 = arith.addf %36, %38 : vector<8x16xf32>
    %cst_16 = arith.constant dense<0xFF800000> : vector<8xf32>
    %40 = vector.multi_reduction <maximumf>, %39, %cst_16 [1] : vector<8x16xf32> to vector<8xf32>
    %41 = vector.shape_cast %40 : vector<8xf32> to vector<8x1xf32>
    %42 = vector.broadcast %41 : vector<8x1xf32> to vector<8x16xf32>
    %43 = arith.subf %39, %42 : vector<8x16xf32>
    %44 = math.exp %43 : vector<8x16xf32>
    %cst_17 = arith.constant dense<0.000000e+00> : vector<8xf32>
    %45 = vector.multi_reduction <add>, %44, %cst_17 [1] : vector<8x16xf32> to vector<8xf32>
    %46 = vector.shape_cast %45 : vector<8xf32> to vector<8x1xf32>
    %47 = tpu.reciprocal %46 {approx = true} : vector<8x1xf32> -> vector<8x1xf32>
    %48 = arith.mulf %46, %47 : vector<8x1xf32>
    %cst_18 = arith.constant 2.000000e+00 : f32
    %49 = vector.broadcast %cst_18 : f32 to vector<8x1xf32>
    %50 = arith.subf %49, %48 : vector<8x1xf32>
    %51 = arith.mulf %47, %50 : vector<8x1xf32>
    %52 = vector.broadcast %51 : vector<8x1xf32> to vector<8x16xf32>
    %53 = arith.mulf %44, %52 : vector<8x16xf32>
    %54 = vector.shape_cast %53 : vector<8x16xf32> to vector<8x16x1xf32>
    %c0_19 = arith.constant 0 : index
    %c0_20 = arith.constant 0 : index
    %c0_21 = arith.constant 0 : index
    %55 = vector.load %arg2[%c0_19, %c0_20, %c0_21] : memref<8x16x32xf32, #tpu.memory_space<vmem>>, vector<8x16x32xf32>
    %56 = vector.broadcast %54 : vector<8x16x1xf32> to vector<8x16x32xf32>
    %57 = arith.mulf %56, %55 : vector<8x16x32xf32>
    %cst_22 = arith.constant dense<0.000000e+00> : vector<8x32xf32>
    %58 = vector.multi_reduction <add>, %57, %cst_22 [1] : vector<8x16x32xf32> to vector<8x32xf32>
    %c2 = arith.constant 2 : index
    %c0_23 = arith.constant 0 : index
    %c0_24 = arith.constant 0 : index
    %59 = vector.load %arg3[%c2, %c0_23, %c0_24] : memref<6x32x128xf32, #tpu.memory_space<vmem>>, vector<1x32x128xf32>
    %60 = vector.shape_cast %59 : vector<1x32x128xf32> to vector<32x128xf32>
    %61 = vector.extract_strided_slice %60 {offsets = [0, 0], sizes = [32, 32], strides = [1, 1]} : vector<32x128xf32> to vector<32x32xf32>
    %cst_25 = arith.constant dense<0.000000e+00> : vector<8x32xf32>
    %62 = tpu.matmul %27, %61, %cst_25 {dimension_numbers = #tpu.dot_dimension_numbers<[1], [0], [0], [1], [0, 0, 1, 1], [], []>} : vector<8x32xf32>, vector<32x32xf32>, vector<8x32xf32> -> vector<8x32xf32>
    %c3 = arith.constant 3 : index
    %c0_26 = arith.constant 0 : index
    %c0_27 = arith.constant 0 : index
    %63 = vector.load %arg3[%c3, %c0_26, %c0_27] : memref<6x32x128xf32, #tpu.memory_space<vmem>>, vector<1x32x128xf32>
    %64 = vector.shape_cast %63 : vector<1x32x128xf32> to vector<32x128xf32>
    %65 = vector.extract_strided_slice %64 {offsets = [0, 0], sizes = [32, 32], strides = [1, 1]} : vector<32x128xf32> to vector<32x32xf32>
    %cst_28 = arith.constant dense<0.000000e+00> : vector<8x32xf32>
    %66 = tpu.matmul %58, %65, %cst_28 {dimension_numbers = #tpu.dot_dimension_numbers<[1], [0], [0], [1], [0, 0, 1, 1], [], []>} : vector<8x32xf32>, vector<32x32xf32>, vector<8x32xf32> -> vector<8x32xf32>
    %67 = arith.addf %62, %66 : vector<8x32xf32>
    %68 = vector.extract_strided_slice %2 {offsets = [3, 0], sizes = [1, 32], strides = [1, 1]} : vector<8x128xf32> to vector<1x32xf32>
    %69 = vector.broadcast %68 : vector<1x32xf32> to vector<8x32xf32>
    %70 = arith.addf %67, %69 : vector<8x32xf32>
    %cst_29 = arith.constant 0.000000e+00 : f32
    %71 = vector.broadcast %cst_29 : f32 to vector<8x32xf32>
    %72 = arith.maximumf %70, %71 : vector<8x32xf32>
    %c4 = arith.constant 4 : index
    %c0_30 = arith.constant 0 : index
    %c0_31 = arith.constant 0 : index
    %73 = vector.load %arg3[%c4, %c0_30, %c0_31] : memref<6x32x128xf32, #tpu.memory_space<vmem>>, vector<1x32x128xf32>
    %74 = vector.shape_cast %73 : vector<1x32x128xf32> to vector<32x128xf32>
    %75 = vector.extract_strided_slice %74 {offsets = [0, 0], sizes = [32, 96], strides = [1, 1]} : vector<32x128xf32> to vector<32x96xf32>
    %cst_32 = arith.constant dense<0.000000e+00> : vector<8x96xf32>
    %76 = tpu.matmul %72, %75, %cst_32 {dimension_numbers = #tpu.dot_dimension_numbers<[1], [0], [0], [1], [0, 0, 1, 1], [], []>} : vector<8x32xf32>, vector<32x96xf32>, vector<8x96xf32> -> vector<8x96xf32>
    %77 = vector.extract_strided_slice %2 {offsets = [4, 0], sizes = [1, 96], strides = [1, 1]} : vector<8x128xf32> to vector<1x96xf32>
    %78 = vector.broadcast %77 : vector<1x96xf32> to vector<8x96xf32>
    %79 = arith.addf %76, %78 : vector<8x96xf32>
    %c5 = arith.constant 5 : index
    %c0_33 = arith.constant 0 : index
    %c0_34 = arith.constant 0 : index
    %80 = vector.load %arg3[%c5, %c0_33, %c0_34] : memref<6x32x128xf32, #tpu.memory_space<vmem>>, vector<1x32x128xf32>
    %81 = vector.shape_cast %80 : vector<1x32x128xf32> to vector<32x128xf32>
    %82 = vector.extract_strided_slice %81 {offsets = [0, 0], sizes = [32, 96], strides = [1, 1]} : vector<32x128xf32> to vector<32x96xf32>
    %cst_35 = arith.constant dense<0.000000e+00> : vector<8x96xf32>
    %83 = tpu.matmul %1, %82, %cst_35 {dimension_numbers = #tpu.dot_dimension_numbers<[1], [0], [0], [1], [0, 0, 1, 1], [], []>} : vector<8x32xf32>, vector<32x96xf32>, vector<8x96xf32> -> vector<8x96xf32>
    %84 = vector.extract_strided_slice %79 {offsets = [0, 0], sizes = [8, 64], strides = [1, 1]} : vector<8x96xf32> to vector<8x64xf32>
    %85 = vector.extract_strided_slice %83 {offsets = [0, 0], sizes = [8, 64], strides = [1, 1]} : vector<8x96xf32> to vector<8x64xf32>
    %86 = arith.addf %84, %85 : vector<8x64xf32>
    %87 = arith.negf %86 : vector<8x64xf32>
    %88 = math.exp %87 : vector<8x64xf32>
    %cst_36 = arith.constant 1.000000e+00 : f32
    %89 = vector.broadcast %cst_36 : f32 to vector<8x64xf32>
    %90 = arith.addf %89, %88 : vector<8x64xf32>
    %91 = arith.divf %89, %90 : vector<8x64xf32>
    %92 = vector.extract_strided_slice %91 {offsets = [0, 0], sizes = [8, 32], strides = [1, 1]} : vector<8x64xf32> to vector<8x32xf32>
    %93 = vector.extract_strided_slice %91 {offsets = [0, 32], sizes = [8, 32], strides = [1, 1]} : vector<8x64xf32> to vector<8x32xf32>
    %94 = vector.extract_strided_slice %79 {offsets = [0, 64], sizes = [8, 32], strides = [1, 1]} : vector<8x96xf32> to vector<8x32xf32>
    %95 = vector.extract_strided_slice %83 {offsets = [0, 64], sizes = [8, 32], strides = [1, 1]} : vector<8x96xf32> to vector<8x32xf32>
    %96 = vector.extract_strided_slice %2 {offsets = [5, 0], sizes = [1, 32], strides = [1, 1]} : vector<8x128xf32> to vector<1x32xf32>
    %97 = vector.broadcast %96 : vector<1x32xf32> to vector<8x32xf32>
    %98 = arith.addf %95, %97 : vector<8x32xf32>
    %99 = arith.mulf %92, %98 : vector<8x32xf32>
    %100 = arith.addf %94, %99 : vector<8x32xf32>
    %101 = math.tanh %100 : vector<8x32xf32>
    %cst_37 = arith.constant 1.000000e+00 : f32
    %102 = vector.broadcast %cst_37 : f32 to vector<8x32xf32>
    %103 = arith.subf %102, %93 : vector<8x32xf32>
    %104 = arith.mulf %103, %101 : vector<8x32xf32>
    %105 = arith.mulf %93, %1 : vector<8x32xf32>
    %106 = arith.addf %104, %105 : vector<8x32xf32>
    %107 = vector.extract_strided_slice %2 {offsets = [6, 0], sizes = [1, 32], strides = [1, 1]} : vector<8x128xf32> to vector<1x32xf32>
    %108 = vector.broadcast %107 : vector<1x32xf32> to vector<8x32xf32>
    %109 = arith.mulf %106, %108 : vector<8x32xf32>
    %cst_38 = arith.constant dense<0.000000e+00> : vector<8xf32>
    %110 = vector.multi_reduction <add>, %109, %cst_38 [1] : vector<8x32xf32> to vector<8xf32>
    %111 = vector.shape_cast %110 : vector<8xf32> to vector<8x1xf32>
    %112 = vector.extract_strided_slice %2 {offsets = [7, 0], sizes = [1, 1], strides = [1, 1]} : vector<8x128xf32> to vector<1x1xf32>
    %113 = vector.broadcast %112 : vector<1x1xf32> to vector<8x1xf32>
    %114 = arith.addf %111, %113 : vector<8x1xf32>
    %cst_39 = arith.constant 0.000000e+00 : f32
    %115 = vector.broadcast %cst_39 : f32 to vector<8x79xf32>
    %116 = tpu.concatenate %106, %53, %114, %115 in 1 : vector<8x32xf32>, vector<8x16xf32>, vector<8x1xf32>, vector<8x79xf32> -> vector<8x128xf32>
    %c0_40 = arith.constant 0 : index
    %c0_41 = arith.constant 0 : index
    %117 = vector.load %arg5[%c0_40, %c0_41] : memref<8x128xf32, #tpu.memory_space<vmem>>, vector<8x128xf32>
    tpu.vector_store %arg5[%c0_40, %c0_41], %116 {strides = array<i32>} : memref<8x128xf32, #tpu.memory_space<vmem>>, vector<8x128xf32>,
    return
  }
}

</mosaic_0001>

<llo_original>
// kernel: attn_decoder_forward.1
$region0: #{attn_decoder_forward.1}
  #allocation0 [shape = 'u32[]', space=smem, size = 0x4, offset = 0x4, fixed_abs, tag = 'smem constant byte address 0x4 - core index']
  #allocation1 [shape = 'u32[144,128]{1,0:T(1,128)}', space=vmem, size = 0x12000, scoped, tag = 'internal scratch']
  %s0 = inlined_call_operand.vmem [shape: f32[8,1], index: 0, kind: input, shape index: {}]
  %s1 = inlined_call_operand.vmem [shape: f32[8,32], index: 1, kind: input, shape index: {}]
  %s2 = inlined_call_operand.hbm [shape: f32[8,16,32], index: 2, kind: input, shape index: {}]
  %s3 = inlined_call_operand.hbm [shape: f32[6,32,128], index: 3, kind: input, shape index: {}]
  %s4 = inlined_call_operand.vmem [shape: f32[8,128], index: 4, kind: input, shape index: {}]
  %s5 = inlined_call_operand.vmem [shape: f32[8,128], index: 5, kind: output, shape index: {}]
  %s6 = sld [smem:[#allocation0]]
  $region38: #{attn_decoder_forward.1} parent=0
    _
  %s8 = ssub.s32 1, %s6
  %s9 = scalar_select 0, %s8, %s6
  $region1: #{attn_decoder_forward.1} parent=0
    #allocation2 [shape = 'u8[65536]{0}', space=vmem, size = 0x10000, scoped, tag = 'input window, operand 2, single buffered']
    #allocation3 [shape = 's32[1]{0}', space=sflag, size = 0x4, scoped, tag = 'scoped memory for attn_decoder_forward.1']
    #allocation4 [shape = 'u8[98304]{0}', space=vmem, size = 0x18000, scoped, tag = 'input window, operand 3, single buffered']
    #allocation5 [shape = 's32[1]{0}', space=sflag, size = 0x4, scoped, tag = 'scoped memory for attn_decoder_forward.1']
    %10 = vsyncpa [#allocation3], 0
    %11 = vsyncpa [#allocation5], 0
    // Predicated region
    $region2: #{attn_decoder_forward.1} parent=1 // pred_check
      _
    $region3: #{attn_decoder_forward.1} parent=1 // pred_check_branch
      %13 = sbr.rel (0) target = $region5
    $region4: #{attn_decoder_forward.1} parent=1 // pred_region
      _
    $region5: #{attn_decoder_forward.1} parent=1 // pred_fallthru
      _
    // Predicated region
    $region6: #{attn_decoder_forward.1} parent=1 // pred_check
      _
    $region7: #{attn_decoder_forward.1} parent=1 // pred_check_branch
      %15 = sbr.rel (0) target = $region9
    $region8: #{attn_decoder_forward.1} parent=1 // pred_region
      _
    $region9: #{attn_decoder_forward.1} parent=1 // pred_fallthru
      _
    // Predicated region
    $region10: #{attn_decoder_forward.1} parent=1 // pred_check
      _
    $region11: #{attn_decoder_forward.1} parent=1 // pred_check_branch
      %17 = sbr.rel (0) target = $region13
    $region12: #{attn_decoder_forward.1} parent=1 // pred_region
      %s19 = ssub.s32 2048, 2048
      %20 = vsyncadd [#allocation3], %s19
      %s21 = sshll.u32 [#allocation2], 4
      %s22 = int_to_ptr.vmem [resolvable:$true] %s21
      %27 = dma.hbm_to_vmem [thread:$0]  %s2, 2048, %s22, [#allocation3], 128, 128, 8
    $region13: #{attn_decoder_forward.1} parent=1 // pred_fallthru
      _
    // Predicated region
    $region14: #{attn_decoder_forward.1} parent=1 // pred_check
      _
    $region15: #{attn_decoder_forward.1} parent=1 // pred_check_branch
      %29 = sbr.rel (0) target = $region17
    $region16: #{attn_decoder_forward.1} parent=1 // pred_region
      %s31 = ssub.s32 3072, 3072
      %32 = vsyncadd [#allocation5], %s31
      %s33 = sshll.u32 [#allocation4], 4
      %s34 = int_to_ptr.vmem [resolvable:$true] %s33
      %39 = dma.hbm_to_vmem [thread:$0]  %s3, 3072, %s34, [#allocation5], 128, 128, 8
    $region17: #{attn_decoder_forward.1} parent=1 // pred_fallthru
      _
    // Predicated region
    $region18: #{attn_decoder_forward.1} parent=1 // pred_check
      _
    $region19: #{attn_decoder_forward.1} parent=1 // pred_check_branch
      %41 = sbr.rel (0) target = $region21
    $region20: #{attn_decoder_forward.1} parent=1 // pred_region
      _
    $region21: #{attn_decoder_forward.1} parent=1 // pred_fallthru
      _
    // Predicated region
    $region22: #{attn_decoder_forward.1} parent=1 // pred_check
      _
    $region23: #{attn_decoder_forward.1} parent=1 // pred_check_branch
      %43 = sbr.rel (0) target = $region25
    $region24: #{attn_decoder_forward.1} parent=1 // pred_region
      %44 = dma.done [#allocation3], 2048
    $region25: #{attn_decoder_forward.1} parent=1 // pred_fallthru
      _
    // Predicated region
    $region26: #{attn_decoder_forward.1} parent=1 // pred_check
      _
    $region27: #{attn_decoder_forward.1} parent=1 // pred_check_branch
      %46 = sbr.rel (0) target = $region29
    $region28: #{attn_decoder_forward.1} parent=1 // pred_region
      %47 = dma.done [#allocation5], 3072
    $region29: #{attn_decoder_forward.1} parent=1 // pred_fallthru
      _
    %v48 = vld [vmem:[%s0] sm:$0xff]
    %v49 = vld [vmem:[%s1] sm:$0xff]
    %v50 = vld [vmem:[%s4] sm:$0xff]
    %52 = vset.pattern.permute.xlu0 0
    %53 = vperm.xlu0 %52, %v48
    %v54 = vpop.permute.xlu0 %53
    %v56 = vlaneseq
    %v57 = vshrl.u32 %v56, 7
    %v58 = vsub.s32 0, %v57
    %v59 = vrot.slane %v50, %v58
    %v60 = vmul.f32 %v54, %v59
    %v61 = vlaneseq
    %v62 = vshrl.u32 %v61, 7
    %v63 = vsub.s32 1, %v62
    %v64 = vrot.slane %v50, %v63
    %v65 = vadd.f32 %v60, %v64
    %vm66 = vcmask 261120
    %v67 = vsel %vm66, %v65, 0.0
    %68 = vadd.xlane.f32.xlu0 %v67
    %v69 = vpop.xlane.xlu0 %68
    %v70 = vrcp.pop 32.0
    %v71 = vmul.f32 %v69, %v70
    %v72 = vmul.f32 %v65, %v65
    %v73 = vsel %vm66, %v72, 0.0
    %74 = vadd.xlane.f32.xlu0 %v73
    %v75 = vpop.xlane.xlu0 %74
    %v76 = vmul.f32 %v75, %v70
    %v77 = vmul.f32 %v71, %v71
    %v78 = vsub.f32 %v76, %v77
    %v79 = vsub.f32 %v65, %v71
    %v80 = vadd.f32 %v78, 1e-05
    %v81 = vrsqrt.pop %v80
    %v82 = vmul.f32 %v79, %v81
    %v83 = vld [vmem:[#allocation4] sm:$0xff]
    %v84 = vld [vmem:[#allocation4 + $0x8] sm:$0xff]
    %v85 = vld [vmem:[#allocation4 + $0x10] sm:$0xff]
    %v86 = vld [vmem:[#allocation4 + $0x18] sm:$0xff]
    %s87 = scalar_lea.vmem [#allocation4], 32
    %v88 = vld [vmem:[%s87] sm:$0xff]
    %v89 = vld [vmem:[%s87 + $0x8] sm:$0xff]
    %v90 = vld [vmem:[%s87 + $0x10] sm:$0xff]
    %v91 = vld [vmem:[%s87 + $0x18] sm:$0xff]
    %v93 = vsel %vm66, %v49, 0
    %95 = vmatprep.subr.mxu0 0.0
    %96 = vmatpush1.msra.mxu0 %v88
    %97 = vmatprep.subr.mxu0 0.0
    %98 = vmatpush1.msra.mxu0 %v89
    %99 = vmatprep.subr.mxu0 0.0
    %100 = vmatpush1.msra.mxu0 %v90
    %101 = vmatprep.subr.mxu0 0.0
    %102 = vmatpush1.msra.mxu0 %v91
    %103 = vmatprep.subr.mxu0 0.0
    %104 = vmatpush1.msra.mxu0 0.0
    %105 = vmatprep.subr.mxu0 0.0
    %106 = vmatpush1.msra.mxu0 0.0
    %107 = vmatprep.subr.mxu0 0.0
    %108 = vmatpush1.msra.mxu0 0.0
    %109 = vmatprep.subr.mxu0 0.0
    %110 = vmatpush1.msra.mxu0 0.0
    %111 = vmatprep.subr.mxu0 0.0
    %112 = vmatpush1.msra.mxu0 0.0
    %113 = vmatprep.subr.mxu0 0.0
    %114 = vmatpush1.msra.mxu0 0.0
    %115 = vmatprep.subr.mxu0 0.0
    %116 = vmatpush1.msra.mxu0 0.0
    %117 = vmatprep.subr.mxu0 0.0
    %118 = vmatpush1.msra.mxu0 0.0
    %119 = vmatprep.subr.mxu0 0.0
    %120 = vmatpush1.msra.mxu0 0.0
    %121 = vmatprep.subr.mxu0 0.0
    %122 = vmatpush1.msra.mxu0 0.0
    %123 = vmatprep.subr.mxu0 0.0
    %124 = vmatpush1.msra.mxu0 0.0
    %125 = vmatprep.subr.mxu0 0.0
    %126 = vmatpush1.msra.mxu0 0.0
    %127 = vmatprep.subr.mxu0 0.0
    %128 = vmatpush1.msra.mxu0 0.0
    %129 = vmatprep.subr.mxu0 0.0
    %130 = vmatpush1.msra.mxu0 0.0
    %131 = vmatprep.subr.mxu0 0.0
    %132 = vmatpush1.msra.mxu0 0.0
    %133 = vmatprep.subr.mxu0 0.0
    %134 = vmatpush1.msra.mxu0 0.0
    %135 = vmatprep.subr.mxu0 0.0
    %136 = vmatpush1.msra.mxu0 0.0
    %137 = vmatprep.subr.mxu0 0.0
    %138 = vmatpush1.msra.mxu0 0.0
    %139 = vmatprep.subr.mxu0 0.0
    %140 = vmatpush1.msra.mxu0 0.0
    %141 = vmatprep.subr.mxu0 0.0
    %142 = vmatpush1.msra.mxu0 0.0
    %143 = vmatprep.subr.mxu0 0.0
    %144 = vmatpush1.msra.mxu0 0.0
    %145 = vmatprep.subr.mxu0 0.0
    %146 = vmatpush1.msra.mxu0 0.0
    %147 = vmatprep.subr.mxu0 0.0
    %148 = vmatpush1.msra.mxu0 0.0
    %149 = vmatprep.subr.mxu0 0.0
    %150 = vmatpush1.msra.mxu0 0.0
    %151 = vmatprep.subr.mxu0 0.0
    %152 = vmatpush1.msra.mxu0 0.0
    %153 = vmatprep.subr.mxu0 0.0
    %154 = vmatpush1.msra.mxu0 0.0
    %155 = vmatprep.subr.mxu0 0.0
    %156 = vmatpush1.msra.mxu0 0.0
    %157 = vmatprep.subr.mxu0 0.0
    %158 = vmatpush1.msra.mxu0 0.0
    %159 = vmatprep.mubr.f32.mxu0 0.0
    %160 = vmatmul.mubr.f32.gmra.mrb[0].mxu0 %v93
    %v161 = vpop.f32.mrb[0].mxu0
    %v162 = vadd.f32 0.0, %v161
    %v163 = vpop.f32.mrb[0].mxu0
    %164 = vdwg.mxu0
    %v166 = vsel %vm66, %v82, 0
    %168 = vmatprep.subr.mxu0 0.0
    %169 = vmatpush1.msra.mxu0 %v83
    %170 = vmatprep.subr.mxu0 0.0
    %171 = vmatpush1.msra.mxu0 %v84
    %172 = vmatprep.subr.mxu0 0.0
    %173 = vmatpush1.msra.mxu0 %v85
    %174 = vmatprep.subr.mxu0 0.0
    %175 = vmatpush1.msra.mxu0 %v86
    %176 = vmatprep.subr.mxu0 0.0
    %177 = vmatpush1.msra.mxu0 0.0
    %178 = vmatprep.subr.mxu0 0.0
    %179 = vmatpush1.msra.mxu0 0.0
    %180 = vmatprep.subr.mxu0 0.0
    %181 = vmatpush1.msra.mxu0 0.0
    %182 = vmatprep.subr.mxu0 0.0
    %183 = vmatpush1.msra.mxu0 0.0
    %184 = vmatprep.subr.mxu0 0.0
    %185 = vmatpush1.msra.mxu0 0.0
    %186 = vmatprep.subr.mxu0 0.0
    %187 = vmatpush1.msra.mxu0 0.0
    %188 = vmatprep.subr.mxu0 0.0
    %189 = vmatpush1.msra.mxu0 0.0
    %190 = vmatprep.subr.mxu0 0.0
    %191 = vmatpush1.msra.mxu0 0.0
    %192 = vmatprep.subr.mxu0 0.0
    %193 = vmatpush1.msra.mxu0 0.0
    %194 = vmatprep.subr.mxu0 0.0
    %195 = vmatpush1.msra.mxu0 0.0
    %196 = vmatprep.subr.mxu0 0.0
    %197 = vmatpush1.msra.mxu0 0.0
    %198 = vmatprep.subr.mxu0 0.0
    %199 = vmatpush1.msra.mxu0 0.0
    %200 = vmatprep.subr.mxu0 0.0
    %201 = vmatpush1.msra.mxu0 0.0
    %202 = vmatprep.subr.mxu0 0.0
    %203 = vmatpush1.msra.mxu0 0.0
    %204 = vmatprep.subr.mxu0 0.0
    %205 = vmatpush1.msra.mxu0 0.0
    %206 = vmatprep.subr.mxu0 0.0
    %207 = vmatpush1.msra.mxu0 0.0
    %208 = vmatprep.subr.mxu0 0.0
    %209 = vmatpush1.msra.mxu0 0.0
    %210 = vmatprep.subr.mxu0 0.0
    %211 = vmatpush1.msra.mxu0 0.0
    %212 = vmatprep.subr.mxu0 0.0
    %213 = vmatpush1.msra.mxu0 0.0
    %214 = vmatprep.subr.mxu0 0.0
    %215 = vmatpush1.msra.mxu0 0.0
    %216 = vmatprep.subr.mxu0 0.0
    %217 = vmatpush1.msra.mxu0 0.0
    %218 = vmatprep.subr.mxu0 0.0
    %219 = vmatpush1.msra.mxu0 0.0
    %220 = vmatprep.subr.mxu0 0.0
    %221 = vmatpush1.msra.mxu0 0.0
    %222 = vmatprep.subr.mxu0 0.0
    %223 = vmatpush1.msra.mxu0 0.0
    %224 = vmatprep.subr.mxu0 0.0
    %225 = vmatpush1.msra.mxu0 0.0
    %226 = vmatprep.subr.mxu0 0.0
    %227 = vmatpush1.msra.mxu0 0.0
    %228 = vmatprep.subr.mxu0 0.0
    %229 = vmatpush1.msra.mxu0 0.0
    %230 = vmatprep.subr.mxu0 0.0
    %231 = vmatpush1.msra.mxu0 0.0
    %232 = vmatprep.mubr.f32.mxu0 0.0
    %233 = vmatmul.mubr.f32.gmra.mrb[0].mxu0 %v166
    %v234 = vpop.f32.mrb[0].mxu0
    %v235 = vadd.f32 %v162, %v234
    %v236 = vpop.f32.mrb[0].mxu0
    %237 = vdwg.mxu0
    %v238 = vlaneseq
    %v239 = vshrl.u32 %v238, 7
    %v240 = vsub.s32 2, %v239
    %v241 = vrot.slane %v50, %v240
    %v242 = vadd.f32 %v235, %v241
    %vm243 = vcmask 130048
    %v244 = vsel %vm243, %v242, -inf
    %245 = vmax.xlane.f32.xlu0 %v244
    %v246 = vpop.xlane.xlu0 %245
    %v247 = vsub.f32 %v242, %v246
    %v248 = vmul.f32 %v247, 1.442695
    %v249 = vpow.pop %v248
    %v250 = vsel %vm243, %v249, 0.0
    %251 = vadd.xlane.f32.xlu0 %v250
    %v252 = vpop.xlane.xlu0 %251
    %v253 = vrcp.pop %v252
    %v254 = vmul.f32 %v252, %v253
    %v255 = vsub.f32 2.0, %v254
    %v256 = vmul.f32 %v253, %v255
    %v257 = vmul.f32 %v249, %v256
    %v258 = vlaneseq
    %v259 = vshrl.u32 %v258, 7
    %v260 = vsub.s32 0, %v259
    %v261 = vrot.slane %v257, %v260
    %263 = vbcast.lane.b32.xlu0 %v261, 256
    %v264 = vpop.permute.xlu0 %263
    %s266 = sor.u32 256, 8
    %267 = vbcast.lane.b32.xlu0 %v261, %s266
    %v268 = vpop.permute.xlu0 %267
    %v269 = vlaneseq
    %v270 = vshrl.u32 %v269, 7
    %v271 = vsub.s32 1, %v270
    %v272 = vrot.slane %v257, %v271
    %274 = vbcast.lane.b32.xlu0 %v272, 256
    %v275 = vpop.permute.xlu0 %274
    %s277 = sor.u32 256, 8
    %278 = vbcast.lane.b32.xlu0 %v272, %s277
    %v279 = vpop.permute.xlu0 %278
    %v280 = vlaneseq
    %v281 = vshrl.u32 %v280, 7
    %v282 = vsub.s32 2, %v281
    %v283 = vrot.slane %v257, %v282
    %285 = vbcast.lane.b32.xlu0 %v283, 256
    %v286 = vpop.permute.xlu0 %285
    %s288 = sor.u32 256, 8
    %289 = vbcast.lane.b32.xlu0 %v283, %s288
    %v290 = vpop.permute.xlu0 %289
    %v291 = vlaneseq
    %v292 = vshrl.u32 %v291, 7
    %v293 = vsub.s32 3, %v292
    %v294 = vrot.slane %v257, %v293
    %296 = vbcast.lane.b32.xlu0 %v294, 256
    %v297 = vpop.permute.xlu0 %296
    %s299 = sor.u32 256, 8
    %300 = vbcast.lane.b32.xlu0 %v294, %s299
    %v301 = vpop.permute.xlu0 %300
    %v302 = vlaneseq
    %v303 = vshrl.u32 %v302, 7
    %v304 = vsub.s32 4, %v303
    %v305 = vrot.slane %v257, %v304
    %307 = vbcast.lane.b32.xlu0 %v305, 256
    %v308 = vpop.permute.xlu0 %307
    %s310 = sor.u32 256, 8
    %311 = vbcast.lane.b32.xlu0 %v305, %s310
    %v312 = vpop.permute.xlu0 %311
    %v313 = vlaneseq
    %v314 = vshrl.u32 %v313, 7
    %v315 = vsub.s32 5, %v314
    %v316 = vrot.slane %v257, %v315
    %318 = vbcast.lane.b32.xlu0 %v316, 256
    %v319 = vpop.permute.xlu0 %318
    %s321 = sor.u32 256, 8
    %322 = vbcast.lane.b32.xlu0 %v316, %s321
    %v323 = vpop.permute.xlu0 %322
    %v324 = vlaneseq
    %v325 = vshrl.u32 %v324, 7
    %v326 = vsub.s32 6, %v325
    %v327 = vrot.slane %v257, %v326
    %329 = vbcast.lane.b32.xlu0 %v327, 256
    %v330 = vpop.permute.xlu0 %329
    %s332 = sor.u32 256, 8
    %333 = vbcast.lane.b32.xlu0 %v327, %s332
    %v334 = vpop.permute.xlu0 %333
    %v335 = vlaneseq
    %v336 = vshrl.u32 %v335, 7
    %v337 = vsub.s32 7, %v336
    %v338 = vrot.slane %v257, %v337
    %340 = vbcast.lane.b32.xlu0 %v338, 256
    %v341 = vpop.permute.xlu0 %340
    %s343 = sor.u32 256, 8
    %344 = vbcast.lane.b32.xlu0 %v338, %s343
    %v345 = vpop.permute.xlu0 %344
    %v346 = vld [vmem:[#allocation2] sm:$0xff]
    %v347 = vld [vmem:[#allocation2 + $0x8] sm:$0xff]
    %v348 = vld [vmem:[#allocation2 + $0x10] sm:$0xff]
    %v349 = vld [vmem:[#allocation2 + $0x18] sm:$0xff]
    %v350 = vld [vmem:[#allocation2 + $0x20] sm:$0xff]
    %v351 = vld [vmem:[#allocation2 + $0x28] sm:$0xff]
    %v352 = vld [vmem:[#allocation2 + $0x30] sm:$0xff]
    %v353 = vld [vmem:[#allocation2 + $0x38] sm:$0xff]
    %v354 = vld [vmem:[#allocation2 + $0x40] sm:$0xff]
    %v355 = vld [vmem:[#allocation2 + $0x48] sm:$0xff]
    %v356 = vld [vmem:[#allocation2 + $0x50] sm:$0xff]
    %v357 = vld [vmem:[#allocation2 + $0x58] sm:$0xff]
    %v358 = vld [vmem:[#allocation2 + $0x60] sm:$0xff]
    %v359 = vld [vmem:[#allocation2 + $0x68] sm:$0xff]
    %v360 = vld [vmem:[#allocation2 + $0x70] sm:$0xff]
    %v361 = vld [vmem:[#allocation2 + $0x78] sm:$0xff]
    %v362 = vmul.f32 %v264, %v346
    %v363 = vmul.f32 %v268, %v347
    %v364 = vmul.f32 %v275, %v348
    %v365 = vmul.f32 %v279, %v349
    %v366 = vmul.f32 %v286, %v350
    %v367 = vmul.f32 %v290, %v351
    %v368 = vmul.f32 %v297, %v352
    %v369 = vmul.f32 %v301, %v353
    %v370 = vmul.f32 %v308, %v354
    %v371 = vmul.f32 %v312, %v355
    %v372 = vmul.f32 %v319, %v356
    %v373 = vmul.f32 %v323, %v357
    %v374 = vmul.f32 %v330, %v358
    %v375 = vmul.f32 %v334, %v359
    %v376 = vmul.f32 %v341, %v360
    %v377 = vmul.f32 %v345, %v361
    %v378 = vsel %vm66, %v362, 0.0
    %v379 = vsel %vm66, %v363, 0.0
    %v380 = vadd.f32 %v378, %v379
    %v381 = vrot.slane %v380, 4
    %v382 = vadd.f32 %v380, %v381
    %v383 = vrot.slane %v382, 2
    %v384 = vadd.f32 %v382, %v383
    %v385 = vrot.slane %v384, 1
    %v386 = vadd.f32 %v384, %v385
    %v387 = vsel %vm66, %v364, 0.0
    %v388 = vsel %vm66, %v365, 0.0
    %v389 = vadd.f32 %v387, %v388
    %v390 = vrot.slane %v389, 4
    %v391 = vadd.f32 %v389, %v390
    %v392 = vrot.slane %v391, 2
    %v393 = vadd.f32 %v391, %v392
    %v394 = vrot.slane %v393, 1
    %v395 = vadd.f32 %v393, %v394
    %v396 = vsel %vm66, %v366, 0.0
    %v397 = vsel %vm66, %v367, 0.0
    %v398 = vadd.f32 %v396, %v397
    %v399 = vrot.slane %v398, 4
    %v400 = vadd.f32 %v398, %v399
    %v401 = vrot.slane %v400, 2
    %v402 = vadd.f32 %v400, %v401
    %v403 = vrot.slane %v402, 1
    %v404 = vadd.f32 %v402, %v403
    %v405 = vsel %vm66, %v368, 0.0
    %v406 = vsel %vm66, %v369, 0.0
    %v407 = vadd.f32 %v405, %v406
    %v408 = vrot.slane %v407, 4
    %v409 = vadd.f32 %v407, %v408
    %v410 = vrot.slane %v409, 2
    %v411 = vadd.f32 %v409, %v410
    %v412 = vrot.slane %v411, 1
    %v413 = vadd.f32 %v411, %v412
    %v414 = vsel %vm66, %v370, 0.0
    %v415 = vsel %vm66, %v371, 0.0
    %v416 = vadd.f32 %v414, %v415
    %v417 = vrot.slane %v416, 4
    %v418 = vadd.f32 %v416, %v417
    %v419 = vrot.slane %v418, 2
    %v420 = vadd.f32 %v418, %v419
    %v421 = vrot.slane %v420, 1
    %v422 = vadd.f32 %v420, %v421
    %v423 = vsel %vm66, %v372, 0.0
    %v424 = vsel %vm66, %v373, 0.0
    %v425 = vadd.f32 %v423, %v424
    %v426 = vrot.slane %v425, 4
    %v427 = vadd.f32 %v425, %v426
    %v428 = vrot.slane %v427, 2
    %v429 = vadd.f32 %v427, %v428
    %v430 = vrot.slane %v429, 1
    %v431 = vadd.f32 %v429, %v430
    %v432 = vsel %vm66, %v374, 0.0
    %v433 = vsel %vm66, %v375, 0.0
    %v434 = vadd.f32 %v432, %v433
    %v435 = vrot.slane %v434, 4
    %v436 = vadd.f32 %v434, %v435
    %v437 = vrot.slane %v436, 2
    %v438 = vadd.f32 %v436, %v437
    %v439 = vrot.slane %v438, 1
    %v440 = vadd.f32 %v438, %v439
    %v441 = vsel %vm66, %v376, 0.0
    %v442 = vsel %vm66, %v377, 0.0
    %v443 = vadd.f32 %v441, %v442
    %v444 = vrot.slane %v443, 4
    %v445 = vadd.f32 %v443, %v444
    %v446 = vrot.slane %v445, 2
    %v447 = vadd.f32 %v445, %v446
    %v448 = vrot.slane %v447, 1
    %v449 = vadd.f32 %v447, %v448
    %s450 = scalar_lea.vmem [#allocation4], 64
    %v451 = vld [vmem:[%s450] sm:$0xff]
    %v452 = vld [vmem:[%s450 + $0x8] sm:$0xff]
    %v453 = vld [vmem:[%s450 + $0x10] sm:$0xff]
    %v454 = vld [vmem:[%s450 + $0x18] sm:$0xff]
    %s455 = scalar_lea.vmem [#allocation4], 96
    %v456 = vld [vmem:[%s455] sm:$0xff]
    %v457 = vld [vmem:[%s455 + $0x8] sm:$0xff]
    %v458 = vld [vmem:[%s455 + $0x10] sm:$0xff]
    %v459 = vld [vmem:[%s455 + $0x18] sm:$0xff]
    %vm468 = vcmask 1041409
    %v469 = vsel %vm468, %v395, %v386
    %vm470 = vcmask 1042434
    %v471 = vsel %vm470, %v404, %v469
    %vm472 = vcmask 1043459
    %v473 = vsel %vm472, %v413, %v471
    %vm474 = vcmask 1044484
    %v475 = vsel %vm474, %v422, %v473
    %vm476 = vcmask 1045509
    %v477 = vsel %vm476, %v431, %v475
    %vm478 = vcmask 1046534
    %v479 = vsel %vm478, %v440, %v477
    %vm480 = vcmask 1047559
    %v481 = vsel %vm480, %v449, %v479
    %v482 = vsel %vm66, %v481, 0
    %484 = vmatprep.subr.mxu0 0.0
    %485 = vmatpush1.msra.mxu0 %v456
    %486 = vmatprep.subr.mxu0 0.0
    %487 = vmatpush1.msra.mxu0 %v457
    %488 = vmatprep.subr.mxu0 0.0
    %489 = vmatpush1.msra.mxu0 %v458
    %490 = vmatprep.subr.mxu0 0.0
    %491 = vmatpush1.msra.mxu0 %v459
    %492 = vmatprep.subr.mxu0 0.0
    %493 = vmatpush1.msra.mxu0 0.0
    %494 = vmatprep.subr.mxu0 0.0
    %495 = vmatpush1.msra.mxu0 0.0
    %496 = vmatprep.subr.mxu0 0.0
    %497 = vmatpush1.msra.mxu0 0.0
    %498 = vmatprep.subr.mxu0 0.0
    %499 = vmatpush1.msra.mxu0 0.0
    %500 = vmatprep.subr.mxu0 0.0
    %501 = vmatpush1.msra.mxu0 0.0
    %502 = vmatprep.subr.mxu0 0.0
    %503 = vmatpush1.msra.mxu0 0.0
    %504 = vmatprep.subr.mxu0 0.0
    %505 = vmatpush1.msra.mxu0 0.0
    %506 = vmatprep.subr.mxu0 0.0
    %507 = vmatpush1.msra.mxu0 0.0
    %508 = vmatprep.subr.mxu0 0.0
    %509 = vmatpush1.msra.mxu0 0.0
    %510 = vmatprep.subr.mxu0 0.0
    %511 = vmatpush1.msra.mxu0 0.0
    %512 = vmatprep.subr.mxu0 0.0
    %513 = vmatpush1.msra.mxu0 0.0
    %514 = vmatprep.subr.mxu0 0.0
    %515 = vmatpush1.msra.mxu0 0.0
    %516 = vmatprep.subr.mxu0 0.0
    %517 = vmatpush1.msra.mxu0 0.0
    %518 = vmatprep.subr.mxu0 0.0
    %519 = vmatpush1.msra.mxu0 0.0
    %520 = vmatprep.subr.mxu0 0.0
    %521 = vmatpush1.msra.mxu0 0.0
    %522 = vmatprep.subr.mxu0 0.0
    %523 = vmatpush1.msra.mxu0 0.0
    %524 = vmatprep.subr.mxu0 0.0
    %525 = vmatpush1.msra.mxu0 0.0
    %526 = vmatprep.subr.mxu0 0.0
    %527 = vmatpush1.msra.mxu0 0.0
    %528 = vmatprep.subr.mxu0 0.0
    %529 = vmatpush1.msra.mxu0 0.0
    %530 = vmatprep.subr.mxu0 0.0
    %531 = vmatpush1.msra.mxu0 0.0
    %532 = vmatprep.subr.mxu0 0.0
    %533 = vmatpush1.msra.mxu0 0.0
    %534 = vmatprep.subr.mxu0 0.0
    %535 = vmatpush1.msra.mxu0 0.0
    %536 = vmatprep.subr.mxu0 0.0
    %537 = vmatpush1.msra.mxu0 0.0
    %538 = vmatprep.subr.mxu0 0.0
    %539 = vmatpush1.msra.mxu0 0.0
    %540 = vmatprep.subr.mxu0 0.0
    %541 = vmatpush1.msra.mxu0 0.0
    %542 = vmatprep.subr.mxu0 0.0
    %543 = vmatpush1.msra.mxu0 0.0
    %544 = vmatprep.subr.mxu0 0.0
    %545 = vmatpush1.msra.mxu0 0.0
    %546 = vmatprep.subr.mxu0 0.0
    %547 = vmatpush1.msra.mxu0 0.0
    %548 = vmatprep.mubr.f32.mxu0 0.0
    %549 = vmatmul.mubr.f32.gmra.mrb[0].mxu0 %v482
    %v550 = vpop.f32.mrb[0].mxu0
    %v551 = vadd.f32 0.0, %v550
    %v552 = vpop.f32.mrb[0].mxu0
    %553 = vdwg.mxu0
    %554 = vmatprep.subr.mxu0 0.0
    %555 = vmatpush1.msra.mxu0 %v451
    %556 = vmatprep.subr.mxu0 0.0
    %557 = vmatpush1.msra.mxu0 %v452
    %558 = vmatprep.subr.mxu0 0.0
    %559 = vmatpush1.msra.mxu0 %v453
    %560 = vmatprep.subr.mxu0 0.0
    %561 = vmatpush1.msra.mxu0 %v454
    %562 = vmatprep.subr.mxu0 0.0
    %563 = vmatpush1.msra.mxu0 0.0
    %564 = vmatprep.subr.mxu0 0.0
    %565 = vmatpush1.msra.mxu0 0.0
    %566 = vmatprep.subr.mxu0 0.0
    %567 = vmatpush1.msra.mxu0 0.0
    %568 = vmatprep.subr.mxu0 0.0
    %569 = vmatpush1.msra.mxu0 0.0
    %570 = vmatprep.subr.mxu0 0.0
    %571 = vmatpush1.msra.mxu0 0.0
    %572 = vmatprep.subr.mxu0 0.0
    %573 = vmatpush1.msra.mxu0 0.0
    %574 = vmatprep.subr.mxu0 0.0
    %575 = vmatpush1.msra.mxu0 0.0
    %576 = vmatprep.subr.mxu0 0.0
    %577 = vmatpush1.msra.mxu0 0.0
    %578 = vmatprep.subr.mxu0 0.0
    %579 = vmatpush1.msra.mxu0 0.0
    %580 = vmatprep.subr.mxu0 0.0
    %581 = vmatpush1.msra.mxu0 0.0
    %582 = vmatprep.subr.mxu0 0.0
    %583 = vmatpush1.msra.mxu0 0.0
    %584 = vmatprep.subr.mxu0 0.0
    %585 = vmatpush1.msra.mxu0 0.0
    %586 = vmatprep.subr.mxu0 0.0
    %587 = vmatpush1.msra.mxu0 0.0
    %588 = vmatprep.subr.mxu0 0.0
    %589 = vmatpush1.msra.mxu0 0.0
    %590 = vmatprep.subr.mxu0 0.0
    %591 = vmatpush1.msra.mxu0 0.0
    %592 = vmatprep.subr.mxu0 0.0
    %593 = vmatpush1.msra.mxu0 0.0
    %594 = vmatprep.subr.mxu0 0.0
    %595 = vmatpush1.msra.mxu0 0.0
    %596 = vmatprep.subr.mxu0 0.0
    %597 = vmatpush1.msra.mxu0 0.0
    %598 = vmatprep.subr.mxu0 0.0
    %599 = vmatpush1.msra.mxu0 0.0
    %600 = vmatprep.subr.mxu0 0.0
    %601 = vmatpush1.msra.mxu0 0.0
    %602 = vmatprep.subr.mxu0 0.0
    %603 = vmatpush1.msra.mxu0 0.0
    %604 = vmatprep.subr.mxu0 0.0
    %605 = vmatpush1.msra.mxu0 0.0
    %606 = vmatprep.subr.mxu0 0.0
    %607 = vmatpush1.msra.mxu0 0.0
    %608 = vmatprep.subr.mxu0 0.0
    %609 = vmatpush1.msra.mxu0 0.0
    %610 = vmatprep.subr.mxu0 0.0
    %611 = vmatpush1.msra.mxu0 0.0
    %612 = vmatprep.subr.mxu0 0.0
    %613 = vmatpush1.msra.mxu0 0.0
    %614 = vmatprep.subr.mxu0 0.0
    %615 = vmatpush1.msra.mxu0 0.0
    %616 = vmatprep.subr.mxu0 0.0
    %617 = vmatpush1.msra.mxu0 0.0
    %618 = vmatprep.mubr.f32.mxu0 0.0
    %619 = vmatmul.mubr.f32.gmra.mrb[0].mxu0 %v166
    %v620 = vpop.f32.mrb[0].mxu0
    %v621 = vadd.f32 %v551, %v620
    %v622 = vpop.f32.mrb[0].mxu0
    %623 = vdwg.mxu0
    %v624 = vlaneseq
    %v625 = vshrl.u32 %v624, 7
    %v626 = vsub.s32 3, %v625
    %v627 = vrot.slane %v50, %v626
    %v628 = vadd.f32 %v621, %v627
    %v629 = vmax.f32 %v628, 0.0
    %s630 = scalar_lea.vmem [#allocation4], 128
    %v631 = vld [vmem:[%s630] sm:$0xff]
    %v632 = vld [vmem:[%s630 + $0x8] sm:$0xff]
    %v633 = vld [vmem:[%s630 + $0x10] sm:$0xff]
    %v634 = vld [vmem:[%s630 + $0x18] sm:$0xff]
    %v635 = vlaneseq
    %v636 = vshrl.u32 %v635, 7
    %v637 = vsub.s32 4, %v636
    %v638 = vrot.slane %v50, %v637
    %v640 = vsel %vm66, %v629, 0
    %642 = vmatprep.subr.mxu0 0.0
    %643 = vmatpush1.msra.mxu0 %v631
    %644 = vmatprep.subr.mxu0 0.0
    %645 = vmatpush1.msra.mxu0 %v632
    %646 = vmatprep.subr.mxu0 0.0
    %647 = vmatpush1.msra.mxu0 %v633
    %648 = vmatprep.subr.mxu0 0.0
    %649 = vmatpush1.msra.mxu0 %v634
    %650 = vmatprep.subr.mxu0 0.0
    %651 = vmatpush1.msra.mxu0 0.0
    %652 = vmatprep.subr.mxu0 0.0
    %653 = vmatpush1.msra.mxu0 0.0
    %654 = vmatprep.subr.mxu0 0.0
    %655 = vmatpush1.msra.mxu0 0.0
    %656 = vmatprep.subr.mxu0 0.0
    %657 = vmatpush1.msra.mxu0 0.0
    %658 = vmatprep.subr.mxu0 0.0
    %659 = vmatpush1.msra.mxu0 0.0
    %660 = vmatprep.subr.mxu0 0.0
    %661 = vmatpush1.msra.mxu0 0.0
    %662 = vmatprep.subr.mxu0 0.0
    %663 = vmatpush1.msra.mxu0 0.0
    %664 = vmatprep.subr.mxu0 0.0
    %665 = vmatpush1.msra.mxu0 0.0
    %666 = vmatprep.subr.mxu0 0.0
    %667 = vmatpush1.msra.mxu0 0.0
    %668 = vmatprep.subr.mxu0 0.0
    %669 = vmatpush1.msra.mxu0 0.0
    %670 = vmatprep.subr.mxu0 0.0
    %671 = vmatpush1.msra.mxu0 0.0
    %672 = vmatprep.subr.mxu0 0.0
    %673 = vmatpush1.msra.mxu0 0.0
    %674 = vmatprep.subr.mxu0 0.0
    %675 = vmatpush1.msra.mxu0 0.0
    %676 = vmatprep.subr.mxu0 0.0
    %677 = vmatpush1.msra.mxu0 0.0
    %678 = vmatprep.subr.mxu0 0.0
    %679 = vmatpush1.msra.mxu0 0.0
    %680 = vmatprep.subr.mxu0 0.0
    %681 = vmatpush1.msra.mxu0 0.0
    %682 = vmatprep.subr.mxu0 0.0
    %683 = vmatpush1.msra.mxu0 0.0
    %684 = vmatprep.subr.mxu0 0.0
    %685 = vmatpush1.msra.mxu0 0.0
    %686 = vmatprep.subr.mxu0 0.0
    %687 = vmatpush1.msra.mxu0 0.0
    %688 = vmatprep.subr.mxu0 0.0
    %689 = vmatpush1.msra.mxu0 0.0
    %690 = vmatprep.subr.mxu0 0.0
    %691 = vmatpush1.msra.mxu0 0.0
    %692 = vmatprep.subr.mxu0 0.0
    %693 = vmatpush1.msra.mxu0 0.0
    %694 = vmatprep.subr.mxu0 0.0
    %695 = vmatpush1.msra.mxu0 0.0
    %696 = vmatprep.subr.mxu0 0.0
    %697 = vmatpush1.msra.mxu0 0.0
    %698 = vmatprep.subr.mxu0 0.0
    %699 = vmatpush1.msra.mxu0 0.0
    %700 = vmatprep.subr.mxu0 0.0
    %701 = vmatpush1.msra.mxu0 0.0
    %702 = vmatprep.subr.mxu0 0.0
    %703 = vmatpush1.msra.mxu0 0.0
    %704 = vmatprep.subr.mxu0 0.0
    %705 = vmatpush1.msra.mxu0 0.0
    %706 = vmatprep.mubr.f32.mxu0 0.0
    %707 = vmatmul.mubr.f32.gmra.mrb[0].mxu0 %v640
    %v708 = vpop.f32.mrb[0].mxu0
    %v709 = vadd.f32 %v638, %v708
    %v710 = vpop.f32.mrb[0].mxu0
    %711 = vdwg.mxu0
    %s712 = scalar_lea.vmem [#allocation4], 160
    %v713 = vld [vmem:[%s712] sm:$0xff]
    %v714 = vld [vmem:[%s712 + $0x8] sm:$0xff]
    %v715 = vld [vmem:[%s712 + $0x10] sm:$0xff]
    %v716 = vld [vmem:[%s712 + $0x18] sm:$0xff]
    %717 = vmatprep.subr.mxu0 0.0
    %718 = vmatpush1.msra.mxu0 %v713
    %719 = vmatprep.subr.mxu0 0.0
    %720 = vmatpush1.msra.mxu0 %v714
    %721 = vmatprep.subr.mxu0 0.0
    %722 = vmatpush1.msra.mxu0 %v715
    %723 = vmatprep.subr.mxu0 0.0
    %724 = vmatpush1.msra.mxu0 %v716
    %725 = vmatprep.subr.mxu0 0.0
    %726 = vmatpush1.msra.mxu0 0.0
    %727 = vmatprep.subr.mxu0 0.0
    %728 = vmatpush1.msra.mxu0 0.0
    %729 = vmatprep.subr.mxu0 0.0
    %730 = vmatpush1.msra.mxu0 0.0
    %731 = vmatprep.subr.mxu0 0.0
    %732 = vmatpush1.msra.mxu0 0.0
    %733 = vmatprep.subr.mxu0 0.0
    %734 = vmatpush1.msra.mxu0 0.0
    %735 = vmatprep.subr.mxu0 0.0
    %736 = vmatpush1.msra.mxu0 0.0
    %737 = vmatprep.subr.mxu0 0.0
    %738 = vmatpush1.msra.mxu0 0.0
    %739 = vmatprep.subr.mxu0 0.0
    %740 = vmatpush1.msra.mxu0 0.0
    %741 = vmatprep.subr.mxu0 0.0
    %742 = vmatpush1.msra.mxu0 0.0
    %743 = vmatprep.subr.mxu0 0.0
    %744 = vmatpush1.msra.mxu0 0.0
    %745 = vmatprep.subr.mxu0 0.0
    %746 = vmatpush1.msra.mxu0 0.0
    %747 = vmatprep.subr.mxu0 0.0
    %748 = vmatpush1.msra.mxu0 0.0
    %749 = vmatprep.subr.mxu0 0.0
    %750 = vmatpush1.msra.mxu0 0.0
    %751 = vmatprep.subr.mxu0 0.0
    %752 = vmatpush1.msra.mxu0 0.0
    %753 = vmatprep.subr.mxu0 0.0
    %754 = vmatpush1.msra.mxu0 0.0
    %755 = vmatprep.subr.mxu0 0.0
    %756 = vmatpush1.msra.mxu0 0.0
    %757 = vmatprep.subr.mxu0 0.0
    %758 = vmatpush1.msra.mxu0 0.0
    %759 = vmatprep.subr.mxu0 0.0
    %760 = vmatpush1.msra.mxu0 0.0
    %761 = vmatprep.subr.mxu0 0.0
    %762 = vmatpush1.msra.mxu0 0.0
    %763 = vmatprep.subr.mxu0 0.0
    %764 = vmatpush1.msra.mxu0 0.0
    %765 = vmatprep.subr.mxu0 0.0
    %766 = vmatpush1.msra.mxu0 0.0
    %767 = vmatprep.subr.mxu0 0.0
    %768 = vmatpush1.msra.mxu0 0.0
    %769 = vmatprep.subr.mxu0 0.0
    %770 = vmatpush1.msra.mxu0 0.0
    %771 = vmatprep.subr.mxu0 0.0
    %772 = vmatpush1.msra.mxu0 0.0
    %773 = vmatprep.subr.mxu0 0.0
    %774 = vmatpush1.msra.mxu0 0.0
    %775 = vmatprep.subr.mxu0 0.0
    %776 = vmatpush1.msra.mxu0 0.0
    %777 = vmatprep.subr.mxu0 0.0
    %778 = vmatpush1.msra.mxu0 0.0
    %779 = vmatprep.subr.mxu0 0.0
    %780 = vmatpush1.msra.mxu0 0.0
    %781 = vmatprep.mubr.f32.mxu0 0.0
    %782 = vmatmul.mubr.f32.gmra.mrb[0].mxu0 %v93
    %v783 = vpop.f32.mrb[0].mxu0
    %v784 = vadd.f32 0.0, %v783
    %v785 = vpop.f32.mrb[0].mxu0
    %786 = vdwg.mxu0
    %v787 = vadd.f32 %v709, %v784
    %v788 = vxor.u32 %v787, 2147483648
    %v789 = vmul.f32 %v788, 1.442695
    %v790 = vpow.pop %v789
    %v791 = vadd.f32 %v790, 1.0
    %v792 = vrcp.pop %v791
    %v793 = vmul.f32 1.0, %v792
    %v794 = vlaneseq
    %v795 = vshrl.u32 %v794, 7
    %v796 = vsub.s32 5, %v795
    %v797 = vrot.slane %v50, %v796
    %799 = vrot.lane.b32.xlu0 %v797, 64
    %v800 = vpop.permute.xlu0 %799
    %v802 = vadd.f32 %v784, %v800
    %804 = vrot.lane.b32.xlu0 %v802, 64
    %v805 = vpop.permute.xlu0 %804
    %v807 = vmul.f32 %v793, %v805
    %809 = vrot.lane.b32.xlu0 %v807, 64
    %v810 = vpop.permute.xlu0 %809
    %v812 = vadd.f32 %v709, %v810
    %v813 = vtanh.pop %v812
    %v814 = vsub.f32 1.0, %v793
    %816 = vrot.lane.b32.xlu0 %v813, 96
    %v817 = vpop.permute.xlu0 %816
    %v819 = vmul.f32 %v814, %v817
    %820 = vrot.lane.b32.xlu0 %v49, 32
    %v821 = vpop.permute.xlu0 %820
    %v823 = vmul.f32 %v793, %v821
    %v824 = vadd.f32 %v819, %v823
    %v825 = vlaneseq
    %v826 = vshrl.u32 %v825, 7
    %v827 = vsub.s32 6, %v826
    %v828 = vrot.slane %v50, %v827
    %830 = vrot.lane.b32.xlu0 %v828, 32
    %v831 = vpop.permute.xlu0 %830
    %v833 = vmul.f32 %v824, %v831
    %835 = vrot.lane.b32.xlu0 %v833, 96
    %v836 = vpop.permute.xlu0 %835
    %v838 = vsel %vm66, %v836, 0.0
    %839 = vadd.xlane.f32.xlu0 %v838
    %v840 = vpop.xlane.xlu0 %839
    %v841 = vlaneseq
    %v842 = vshrl.u32 %v841, 7
    %v843 = vsub.s32 7, %v842
    %v844 = vrot.slane %v50, %v843
    %v845 = vadd.f32 %v840, %v844
    %847 = vrot.lane.b32.xlu0 %v824, 96
    %v848 = vpop.permute.xlu0 %847
    %851 = vrot.lane.b32.xlu0 %v257, 32
    %v852 = vpop.permute.xlu0 %851
    %855 = vrot.lane.b32.xlu0 %v845, 48
    %v856 = vpop.permute.xlu0 %855
    %v858 = vsel %vm66, %v848, %v852
    %vm859 = vcmask 392192
    %v860 = vsel %vm859, %v858, %v856
    %vm861 = vcmask 400384
    %v862 = vsel %vm861, %v860, 0.0
    %863 = vst [vmem:[%s5] sm:$0xff] %v862
    // Predicated region
    $region30: #{attn_decoder_forward.1} parent=1 // pred_check
      _
    $region31: #{attn_decoder_forward.1} parent=1 // pred_check_branch
      %865 = sbr.rel (0) target = $region33
    $region32: #{attn_decoder_forward.1} parent=1 // pred_region
      _
    $region33: #{attn_decoder_forward.1} parent=1 // pred_fallthru
      _
    // Predicated region
    $region34: #{attn_decoder_forward.1} parent=1 // pred_check
      _
    $region35: #{attn_decoder_forward.1} parent=1 // pred_check_branch
      %867 = sbr.rel (0) target = $region37
    $region36: #{attn_decoder_forward.1} parent=1 // pred_region
      _
    $region37: #{attn_decoder_forward.1} parent=1 // pred_fallthru
      _
    %868 = vsyncpa [#allocation3], 1
    %869 = vsyncpa [#allocation5], 1

</llo_original>
